<compile_context>
chip_gen: v5e
topology: v5e:2x2
jax: 0.10.0
libtpu: 0.0.40
codegen_flags: <defaults>
</compile_context>

<pallas_src>
import functools

import jax
import jax.numpy as jnp
from jax.experimental import pallas as pl
from jax.experimental.pallas import tpu as pltpu


# ---------------------------------------------------------------------------
# helpers
# ---------------------------------------------------------------------------
def _round_up(x, m):
    return (x + m - 1) // m * m


def _vmem_limit_bytes(*tile_bytes):
    # double-buffered pipeline tiles + 1 MiB headroom, clamped to a budget that is
    # safe on every generation (v7x: 64 MiB physical / 32 MiB scoped VMEM).
    need = 2 * int(sum(tile_bytes)) + (1 << 20)
    return int(min(max(need, 4 << 20), 32 << 20))


# ---------------------------------------------------------------------------
# Pallas kernels
# ---------------------------------------------------------------------------
def _encoder_kernel(x_ref, w_ref, b_ref, z_ref):
    # z_tile = x_tile @ W + b  (row-tiled over nodes; W/b are resident full blocks)
    z_ref[...] = (
        jnp.dot(x_ref[...], w_ref[...], preferred_element_type=jnp.float32)
        + b_ref[...]
    )


def _edge_decoder_kernel(zr_ref, zc_ref, w1t_ref, w1b_ref, b1_ref, w2_ref, b2_ref,
                         o_ref, *, sigmoid):
    # Everything is edge-on-lanes (transposed):
    #   h^T = W1_top^T @ z_row^T + W1_bot^T @ z_col^T + b1   -> (H, tile_e) lane-dense
    # (W1 pre-split so the (E, 2H) concat never exists; both matmuls on the MXU.)
    h = jnp.dot(w1t_ref[...], zr_ref[...], preferred_element_type=jnp.float32)
    h = h + jnp.dot(w1b_ref[...], zc_ref[...], preferred_element_type=jnp.float32)
    h = jnp.maximum(h + b1_ref[...], 0.0)                       # (H, tile_e)
    # lin2 with out_channels == 1: VPU broadcast multiply + sublane reduce over H,
    # producing a lane-dense (1, tile_e) row (no width-1 MXU matmul, no masked
    # column stores).
    out = jnp.sum(h * w2_ref[...], axis=0, keepdims=True) + b2_ref[0, 0]
    if sigmoid:
        out = jax.nn.sigmoid(out)                               # EUP
    o_ref[...] = out                                            # (1, tile_e)


# ---------------------------------------------------------------------------
# Wrappers
# ---------------------------------------------------------------------------
def gae_encode(x, w_enc, b_enc, *, tile_n=512):
    """GAE.forward / GAE.encode: encoder (Linear F->H), row-tiled over nodes."""
    N, F = x.shape
    H = w_enc.shape[1]
    tile_n = min(tile_n, _round_up(N, 8))
    n_pad = _round_up(N, tile_n)
    if n_pad != N:
        x = jnp.pad(x, ((0, n_pad - N), (0, 0)))
    itemsize = 4
    cost = pl.CostEstimate(
        flops=2 * n_pad * F * H,
        transcendentals=0,
        bytes_accessed=itemsize * (n_pad * F + F * H + H + n_pad * H),
    )
    z = pl.pallas_call(
        _encoder_kernel,
        out_shape=jax.ShapeDtypeStruct((n_pad, H), jnp.float32),
        grid=(n_pad // tile_n,),
        in_specs=[
            pl.BlockSpec((tile_n, F), lambda i: (i, 0)),   # node tile of x
            pl.BlockSpec((F, H), lambda i: (0, 0)),        # full weight, resident
            pl.BlockSpec((1, H), lambda i: (0, 0)),        # bias
        ],
        out_specs=pl.BlockSpec((tile_n, H), lambda i: (i, 0)),
        compiler_params=pltpu.CompilerParams(
            dimension_semantics=("parallel",),
            vmem_limit_bytes=_vmem_limit_bytes(
                itemsize * tile_n * F, itemsize * F * H,
                itemsize * H, itemsize * tile_n * H),
        ),
        cost_estimate=cost,
    )(x, w_enc, b_enc.reshape(1, H))
    return z[:N]


def gae_decode(z, edge_index, params, sigmoid=False, *, tile_e=1024):
    """EdgeDecoder.forward: gather in JAX (index glue), concat fused away via split W1,
    MLP hot path in a single edge-tiled Pallas kernel with edges on the lane axis."""
    w1, b1, w2, b2 = params
    two_h, H = w1.shape
    O = w2.shape[1]
    assert two_h == 2 * H
    # TODO(synk): for out_channels > 1 fall back to an MXU lin2; the VPU
    # mul+sublane-reduce / lane-dense output path below assumes O == 1 (module default).
    assert O == 1

    row, col = edge_index[0], edge_index[1]
    # Gather node embeddings per edge (plain JAX/XLA), then go edge-on-lanes.
    zr_t = z[row].T                     # (H, E)
    zc_t = z[col].T                     # (H, E)
    E = zr_t.shape[1]

    tile_e = min(tile_e, _round_up(max(E, 1), 128))
    e_pad = _round_up(E, tile_e)
    if e_pad != E:
        pad = ((0, 0), (0, e_pad - E))
        zr_t = jnp.pad(zr_t, pad)
        zc_t = jnp.pad(zc_t, pad)
    n_tiles = e_pad // tile_e

    w1_top_t = w1[:H].T                 # (H, H): acts on z[row]^T
    w1_bot_t = w1[H:].T                 # (H, H): acts on z[col]^T
    b1_col = b1.reshape(H, 1)
    w2_col = w2.reshape(H, 1)
    b2_2d = b2.reshape(1, 1)

    itemsize = 4
    kernel = functools.partial(_edge_decoder_kernel, sigmoid=sigmoid)
    cost = pl.CostEstimate(
        flops=4 * e_pad * H * H + 4 * e_pad * H,
        transcendentals=e_pad if sigmoid else 0,
        bytes_accessed=itemsize * (2 * e_pad * H + 2 * H * H + 2 * H + 1 + e_pad),
    )
    out = pl.pallas_call(
        kernel,
        out_shape=jax.ShapeDtypeStruct((1, e_pad), jnp.float32),
        grid=(n_tiles,),
        in_specs=[
            pl.BlockSpec((H, tile_e), lambda i: (0, i)),   # z[row]^T edge tile
            pl.BlockSpec((H, tile_e), lambda i: (0, i)),   # z[col]^T edge tile
            pl.BlockSpec((H, H), lambda i: (0, 0)),        # W1 top half, transposed
            pl.BlockSpec((H, H), lambda i: (0, 0)),        # W1 bottom half, transposed
            pl.BlockSpec((H, 1), lambda i: (0, 0)),        # b1 as column
            pl.BlockSpec((H, 1), lambda i: (0, 0)),        # w2 as column
            pl.BlockSpec((1, 1), lambda i: (0, 0)),        # b2 scalar
        ],
        # lane-dense output row: edge dim rides the 128-wide lane axis
        out_specs=pl.BlockSpec((1, tile_e), lambda i: (0, i)),
        compiler_params=pltpu.CompilerParams(
            dimension_semantics=("parallel",),
            vmem_limit_bytes=_vmem_limit_bytes(
                2 * itemsize * H * tile_e, 2 * itemsize * H * H,
                2 * itemsize * H, itemsize, itemsize * tile_e),
        ),
        cost_estimate=cost,
    )(zr_t, zc_t, w1_top_t, w1_bot_t, b1_col, w2_col, b2_2d)

    return out[0, :E].reshape(E, 1)


# ---------------------------------------------------------------------------
# Deterministic parameter init (PyTorch-Linear-like uniform bounds)
# ---------------------------------------------------------------------------
def _linear_params(key, fan_in, fan_out):
    k_w, k_b = jax.random.split(key)
    bound = 1.0 / jnp.sqrt(fan_in)
    w = jax.random.uniform(k_w, (fan_in, fan_out), jnp.float32, -bound, bound)
    b = jax.random.uniform(k_b, (fan_out,), jnp.float32, -bound, bound)
    return w, b


if __name__ == "__main__":
    N, F, H, O, E = 16, 16, 8, 1, 8  # nodes, in-features, hidden_channels, out, edges

    root = jax.random.PRNGKey(0)
    k_x, k_enc, k_l1, k_l2, k_e = jax.random.split(root, 5)

    # inputs
    x = jax.random.normal(k_x, (N, F), jnp.float32)
    edge_index = jnp.stack(
        [
            jax.random.randint(k_e, (E,), 0, N, dtype=jnp.int32),
            jax.random.randint(jax.random.fold_in(k_e, 1), (E,), 0, N, dtype=jnp.int32),
        ],
        axis=0,
    )  # (2, E)

    # parameters
    w_enc, b_enc = _linear_params(k_enc, F, H)          # encoder: Linear(F, H)
    w1, b1 = _linear_params(k_l1, 2 * H, H)             # EdgeDecoder.lin1
    w2, b2 = _linear_params(k_l2, H, O)                 # EdgeDecoder.lin2
    dec_params = (w1, b1, w2, b2)

    # GAE.forward == encode
    z = gae_encode(x, w_enc, b_enc)
    # GAE.decode (EdgeDecoder), both sigmoid branches
    pred = gae_decode(z, edge_index, dec_params, sigmoid=False)
    pred_sig = gae_decode(z, edge_index, dec_params, sigmoid=True)

    jax.block_until_ready((z, pred, pred_sig))

    # reference check (pure JAX)
    z_ref = x @ w_enc + b_enc
    zc = jnp.concatenate([z_ref[edge_index[0]], z_ref[edge_index[1]]], axis=-1)
    pred_ref = jnp.maximum(zc @ w1 + b1, 0.0) @ w2 + b2
    assert z.shape == (N, H)
    assert pred.shape == (E, O)
    assert pred_sig.shape == (E, O)
    assert jnp.allclose(z, z_ref, atol=1e-5), "encoder mismatch"
    assert jnp.allclose(pred, pred_ref, atol=1e-5), "decoder mismatch"
    assert jnp.allclose(pred_sig, jax.nn.sigmoid(pred_ref), atol=1e-5), "sigmoid mismatch"

    print("KERNEL_OK")
</pallas_src>

<mosaic_0001>
module attributes {stable_mosaic.version = 11 : i64} {
  func.func @_encoder_kernel(%arg0: i32, %arg1: memref<16x16xf32, #tpu.memory_space<vmem>>, %arg2: memref<16x8xf32, #tpu.memory_space<vmem>>, %arg3: memref<1x8xf32, #tpu.memory_space<vmem>>, %arg4: memref<16x8xf32, #tpu.memory_space<vmem>>) attributes {dimension_semantics = [#tpu.dimension_semantics<parallel>], iteration_bounds = array<i64: 1>, scalar_prefetch = 0 : i64, scratch_operands = 0 : i64, tpu.core_type = #tpu.core_type<tc>, window_params = [{transform_indices = @transform_0, window_bounds = array<i64: 16, 16>}, {pipeline_mode = #tpu.pipeline_mode<synchronous>, transform_indices = @transform_1, window_bounds = array<i64: 16, 8>}, {pipeline_mode = #tpu.pipeline_mode<synchronous>, transform_indices = @transform_2, window_bounds = array<i64: 1, 8>}, {transform_indices = @transform_3, window_bounds = array<i64: 16, 8>}]} {
    %c0 = arith.constant 0 : index
    %c0_0 = arith.constant 0 : index
    %0 = vector.load %arg1[%c0, %c0_0] : memref<16x16xf32, #tpu.memory_space<vmem>>, vector<16x16xf32>
    %c0_1 = arith.constant 0 : index
    %c0_2 = arith.constant 0 : index
    %1 = vector.load %arg2[%c0_1, %c0_2] : memref<16x8xf32, #tpu.memory_space<vmem>>, vector<16x8xf32>
    %cst = arith.constant dense<0.000000e+00> : vector<16x8xf32>
    %2 = tpu.matmul %0, %1, %cst {dimension_numbers = #tpu.dot_dimension_numbers<[1], [0], [0], [1], [0, 0, 1, 1], [], []>} : vector<16x16xf32>, vector<16x8xf32>, vector<16x8xf32> -> vector<16x8xf32>
    %c0_3 = arith.constant 0 : index
    %c0_4 = arith.constant 0 : index
    %3 = vector.load %arg3[%c0_3, %c0_4] : memref<1x8xf32, #tpu.memory_space<vmem>>, vector<1x8xf32>
    %4 = vector.broadcast %3 : vector<1x8xf32> to vector<16x8xf32>
    %5 = arith.addf %2, %4 : vector<16x8xf32>
    %c0_5 = arith.constant 0 : index
    %c0_6 = arith.constant 0 : index
    %6 = vector.load %arg4[%c0_5, %c0_6] : memref<16x8xf32, #tpu.memory_space<vmem>>, vector<16x8xf32>
    tpu.vector_store %arg4[%c0_5, %c0_6], %5 {strides = array<i32>} : memref<16x8xf32, #tpu.memory_space<vmem>>, vector<16x8xf32>,
    return
  }
  func.func @transform_0(%arg0: i32) -> (i32, i32) {
    %c0_i32 = arith.constant 0 : i32
    %c0_i32_0 = arith.constant 0 : i32
    return %arg0, %c0_i32 : i32, i32
  }
  func.func @transform_1(%arg0: i32) -> (i32, i32) {
    %c0_i32 = arith.constant 0 : i32
    %c0_i32_0 = arith.constant 0 : i32
    %c0_i32_1 = arith.constant 0 : i32
    return %c0_i32, %c0_i32_0 : i32, i32
  }
  func.func @transform_2(%arg0: i32) -> (i32, i32) {
    %c0_i32 = arith.constant 0 : i32
    %c0_i32_0 = arith.constant 0 : i32
    %c0_i32_1 = arith.constant 0 : i32
    return %c0_i32, %c0_i32_0 : i32, i32
  }
  func.func @transform_3(%arg0: i32) -> (i32, i32) {
    %c0_i32 = arith.constant 0 : i32
    %c0_i32_0 = arith.constant 0 : i32
    return %arg0, %c0_i32 : i32, i32
  }
}

</mosaic_0001>

<llo_original>
// kernel: tpu_custom_call.1
$region0: #{tpu_custom_call.1}
  #allocation0 [shape = 'u32[]', space=smem, size = 0x4, offset = 0x4, fixed_abs, tag = 'smem constant byte address 0x4 - core index']
  #allocation1 [shape = 'u32[72,128]{1,0:T(1,128)}', space=vmem, size = 0x9000, scoped, tag = 'internal scratch']
  %s0 = inlined_call_operand.vmem [shape: f32[16,16], index: 0, kind: input, shape index: {}]
  %s1 = inlined_call_operand.vmem [shape: f32[16,8], index: 1, kind: input, shape index: {}]
  %s2 = inlined_call_operand.vmem [shape: f32[1,8], index: 2, kind: input, shape index: {}]
  %s3 = inlined_call_operand.vmem [shape: f32[16,8], index: 3, kind: output, shape index: {}]
  %s4 = sld [smem:[#allocation0]]
  $region22: #{tpu_custom_call.1} parent=0
    _
  %s6 = ssub.s32 1, %s4
  %s7 = scalar_select 0, %s6, %s4
  // Predicated region
  $region2: #{tpu_custom_call.1} parent=0 // pred_check
    _
  $region3: #{tpu_custom_call.1} parent=0 // pred_check_branch
    %9 = sbr.rel (0) target = $region5
  $region4: #{tpu_custom_call.1} parent=0 // pred_region
    _
  $region5: #{tpu_custom_call.1} parent=0 // pred_fallthru
    _
  // Predicated region
  $region6: #{tpu_custom_call.1} parent=0 // pred_check
    _
  $region7: #{tpu_custom_call.1} parent=0 // pred_check_branch
    %11 = sbr.rel (0) target = $region9
  $region8: #{tpu_custom_call.1} parent=0 // pred_region
    _
  $region9: #{tpu_custom_call.1} parent=0 // pred_fallthru
    _
  // Predicated region
  $region10: #{tpu_custom_call.1} parent=0 // pred_check
    _
  $region11: #{tpu_custom_call.1} parent=0 // pred_check_branch
    %13 = sbr.rel (0) target = $region13
  $region12: #{tpu_custom_call.1} parent=0 // pred_region
    _
  $region13: #{tpu_custom_call.1} parent=0 // pred_fallthru
    _
  %v14 = vld [vmem:[%s0] sm:$0xff]
  %v15 = vld [vmem:[%s0 + $0x8] sm:$0xff]
  %v16 = vld [vmem:[%s1] sm:$0xff]
  %v17 = vld [vmem:[%s1 + $0x8] sm:$0xff]
  %v18 = vld [vmem:[%s2] sm:$0x1]
  %v20 = vperm.slane %v18, 0
  %vm22 = vcmask 130048
  %v24 = vsel %vm22, %v14, 0
  %v27 = vsel %vm22, %v15, 0
  %29 = vmatpush.msra.mxu0 0.0
  %30 = vmatpush.msra.mxu0 0.0
  %31 = vmatpush.msra.mxu0 0.0
  %32 = vmatpush.msra.mxu0 0.0
  %33 = vmatpush.msra.mxu0 0.0
  %34 = vmatpush.msra.mxu0 0.0
  %35 = vmatpush.msra.mxu0 0.0
  %36 = vmatpush.msra.mxu0 0.0
  %37 = vmatpush.msra.mxu0 0.0
  %38 = vmatpush.msra.mxu0 0.0
  %39 = vmatpush.msra.mxu0 0.0
  %40 = vmatpush.msra.mxu0 0.0
  %41 = vmatpush.msra.mxu0 0.0
  %42 = vmatpush.msra.mxu0 0.0
  %43 = vmatpush.msra.mxu0 %v17
  %44 = vmatpush.msra.mxu0 %v16
  %45 = vmatmul.f32.gmra.mxu0 %v24
  %v46 = vpop.f32.mrf.mxu0
  %v47 = vadd.f32 %v20, %v46
  %48 = vmatmul.f32.gmra.mxu0 %v27
  %v49 = vpop.f32.mrf.mxu0
  %v50 = vadd.f32 %v20, %v49
  %51 = vdwg.mxu0
  %vm52 = vcmask 64512
  %53 = vst.msk [vmem:[%s3] sm:$0xff] %vm52, %v47
  %54 = vst.msk [vmem:[%s3 + $0x8] sm:$0xff] %vm52, %v50
  // Predicated region
  $region14: #{tpu_custom_call.1} parent=0 // pred_check
    _
  $region15: #{tpu_custom_call.1} parent=0 // pred_check_branch
    %56 = sbr.rel (0) target = $region17
  $region16: #{tpu_custom_call.1} parent=0 // pred_region
    _
  $region17: #{tpu_custom_call.1} parent=0 // pred_fallthru
    _
  // Predicated region
  $region18: #{tpu_custom_call.1} parent=0 // pred_check
    _
  $region19: #{tpu_custom_call.1} parent=0 // pred_check_branch
    %58 = sbr.rel (0) target = $region21
  $region20: #{tpu_custom_call.1} parent=0 // pred_region
    _
  $region21: #{tpu_custom_call.1} parent=0 // pred_fallthru
    _

</llo_original>
